<compile_context>
chip_gen: v7x
topology: tpu7x:2x2x1
jax: 0.10.0
libtpu: 0.0.40
codegen_flags: <defaults>
</compile_context>

<pallas_src>
import jax
import jax.numpy as jnp
from jax.experimental import pallas as pl
from jax.experimental.pallas import tpu as pltpu

_LANES = 128          # vreg lane width
_SUBLANES = 8         # f32 sublanes per vreg
_BLOCK_ROWS = 4096    # 4096*128*4B = 2 MiB/block; x2 pipeline buffers = 4 MiB VMEM
_MIN_PALLAS_N = 1024  # below this a standalone kernel is pure launch overhead


def _round_up(x: int, m: int) -> int:
    return ((x + m - 1) // m) * m


def _make_cost_kernel(n: int, block_rows: int, num_chunks: int):
    block_elems = block_rows * _LANES
    rem = n - (num_chunks - 1) * block_elems   # valid elements in the last block
    last_full = rem == block_elems
    last = num_chunks - 1
    inv_n = 1.0 / float(n)

    def _valid_mask():
        # Local flat element index inside the (last) block vs. the Python
        # constant `rem`; only materialized for the final block / lone block.
        shp = (block_rows, _LANES)
        r = jax.lax.broadcasted_iota(jnp.int32, shp, 0)
        c = jax.lax.broadcasted_iota(jnp.int32, shp, 1)
        return (r * _LANES + c) < rem

    def kernel(v_ref, out_ref, min_acc, sum_acc, ssq_acc, piv_ref):
        i = pl.program_id(0)
        v = v_ref[...]                                  # (block_rows, 128) f32

        # ---- chunk 0: init vector accumulators, pick the pivot (chunk-0 min).
        @pl.when(i == 0)
        def _init():
            if num_chunks == 1 and not last_full:
                m0 = jnp.min(jnp.where(_valid_mask(), v, jnp.inf))
            else:
                m0 = jnp.min(v)            # chunk 0 is always fully valid here
            piv_ref[...] = jnp.zeros_like(piv_ref) + m0
            min_acc[...] = jnp.full_like(min_acc, jnp.inf)
            sum_acc[...] = jnp.zeros_like(sum_acc)
            ssq_acc[...] = jnp.zeros_like(ssq_acc)

        u = v - piv_ref[...]               # pivot-shifted values (stability)

        def _accumulate(mask):
            if mask is None:
                mn = jnp.min(u, axis=0, keepdims=True)
                uz = u
            else:
                mn = jnp.min(jnp.where(mask, u, jnp.inf), axis=0, keepdims=True)
                uz = jnp.where(mask, u, 0.0)
            min_acc[...] = jnp.minimum(min_acc[...], mn)
            sum_acc[...] = sum_acc[...] + jnp.sum(uz, axis=0, keepdims=True)
            ssq_acc[...] = ssq_acc[...] + jnp.sum(uz * uz, axis=0, keepdims=True)

        if last_full:
            _accumulate(None)              # no masking anywhere in the kernel
        else:
            if num_chunks > 1:
                @pl.when(i < last)         # mask-free steady state
                def _steady():
                    _accumulate(None)

            @pl.when(i == last)            # ragged tail: mask built only here
            def _tail():
                _accumulate(_valid_mask())

        # ---- final chunk: collapse accumulators once and emit the scalar.
        @pl.when(i == last)
        def _finalize():
            m_u = jnp.min(min_acc[...], keepdims=True)   # (1, 1)
            s1 = jnp.sum(sum_acc[...], keepdims=True)
            s2 = jnp.sum(ssq_acc[...], keepdims=True)
            nf = jnp.float32(n)
            num = s2 - 2.0 * m_u * s1 + nf * m_u * m_u   # == sum((v - min v)^2)
            den = s1 - nf * m_u                          # == sum(v - min v)
            out_ref[...] = num / (den * den) - jnp.float32(inv_n)

    return kernel


def mycost1_pallas(v1, v2=None):
    """Pallas forward of mycost1 (len_cate := len(v1); v2 is unused, as in PyTorch)."""
    del v2
    n = int(v1.shape[0])
    v = v1.astype(jnp.float32)

    # Lane-dense 2-D view of the 1-D category vector.
    if n % _LANES == 0:
        v2d = v.reshape(n // _LANES, _LANES)          # free bitcast view, no HBM copy
    else:
        # TODO(synk): a fully copy-free ragged path would need 1-D blocks (whose
        # Mosaic value layout is lane-sparse) or a manual-DMA tail; for
        # non-128-aligned n we pad only the last row, which XLA still realizes
        # as one copy.  In-kernel masking uses the true n, so the padded zeros
        # never affect the result.
        v2d = jnp.pad(v, (0, _LANES - n % _LANES)).reshape(-1, _LANES)

    rows = v2d.shape[0]
    block_rows = min(_BLOCK_ROWS, _round_up(rows, _SUBLANES))
    num_chunks = -(-rows // block_rows)

    out = pl.pallas_call(
        _make_cost_kernel(n=n, block_rows=block_rows, num_chunks=num_chunks),
        out_shape=jax.ShapeDtypeStruct((1, 1), jnp.float32),
        grid_spec=pltpu.PrefetchScalarGridSpec(
            num_scalar_prefetch=0,
            grid=(num_chunks,),
            in_specs=[pl.BlockSpec((block_rows, _LANES), lambda i: (i, 0))],
            out_specs=pl.BlockSpec((1, 1), lambda i: (0, 0)),
            # min / sum / sum-of-squares partial accumulators + pivot.
            scratch_shapes=[pltpu.VMEM((1, _LANES), jnp.float32)] * 4,
        ),
        compiler_params=pltpu.CompilerParams(
            dimension_semantics=("arbitrary",)),      # sequential reduction axis
    )(v2d)
    return out[0, 0]


def mycost1_ref(v1, v2=None):
    """Pure-JAX reference with the original PyTorch semantics."""
    del v2
    n = v1.shape[0]
    v = v1.astype(jnp.float32)
    v = v - jnp.min(v)
    v = v / jnp.sum(v)
    d = v - jnp.float32(1.0 / n)
    return jnp.sum(d * d)


def mycost1(v1, v2=None):
    """Production entry point: tiny vectors are left to XLA (launch-overhead
    bound for a standalone kernel); larger ones stream through Pallas."""
    if int(v1.shape[0]) < _MIN_PALLAS_N:
        return mycost1_ref(v1, v2)
    return mycost1_pallas(v1, v2)


if __name__ == "__main__":
    key = jax.random.PRNGKey(0)
    keys = jax.random.split(key, 8)

    def _check(out, ref, rtol, atol, tag):
        out = jax.block_until_ready(out)
        ref = jax.block_until_ready(ref)
        assert jnp.allclose(out, ref, rtol=rtol, atol=atol), (tag, out, ref)

    # 1) Module-sized case (len_cate = 16), forced through the Pallas kernel.
    len_cate = 16
    v1 = jax.random.normal(keys[0], (len_cate,), dtype=jnp.float32)
    v2 = jax.random.normal(keys[1], (len_cate,), dtype=jnp.float32)  # unused, as in PyTorch
    _check(mycost1_pallas(v1, v2), mycost1_ref(v1, v2), 1e-4, 1e-6, "pallas n=16")

    # 1b) Same case through the production dispatcher (pure-JAX small-n path).
    _check(mycost1(v1, v2), mycost1_ref(v1, v2), 1e-5, 1e-7, "dispatch n=16")

    # 2) 128-aligned, single full block: zero-copy wrapper path, no masks.
    v = jax.random.normal(keys[2], (4096,), dtype=jnp.float32)
    _check(mycost1_pallas(v), mycost1_ref(v), 2e-3, 1e-7, "n=4096")

    # 3) Ragged, single (masked) block.
    v = jax.random.normal(keys[3], (200_001,), dtype=jnp.float32)
    _check(mycost1_pallas(v), mycost1_ref(v), 1e-2, 1e-9, "n=200001")

    # 4) 128-aligned multi-chunk (zero-copy, mask-free steady state), 3 chunks.
    v = jax.random.normal(keys[4], (1_572_864,), dtype=jnp.float32)
    _check(mycost1_pallas(v), mycost1_ref(v), 1e-2, 1e-9, "n=1572864")

    # 5) Ragged multi-chunk (masked final block), 2 chunks.
    v = jax.random.normal(keys[5], (999_999,), dtype=jnp.float32)
    _check(mycost1_pallas(v), mycost1_ref(v), 1e-2, 1e-9, "n=999999")

    # 6) Ill-conditioned case from the review (large offset, small spread):
    #    the in-kernel pivot shift keeps the one-pass formula numerically sane.
    v = 1000.0 + 1e-3 * jax.random.normal(keys[6], (4096,), dtype=jnp.float32)
    _check(mycost1_pallas(v), mycost1_ref(v), 5e-3, 1e-9, "offset n=4096")

    print("KERNEL_OK")
</pallas_src>

<mosaic_0001>
module attributes {stable_mosaic.version = 11 : i64} {
  func.func @kernel(%arg0: i32, %arg1: memref<8x128xf32, #tpu.memory_space<vmem>>, %arg2: memref<1x1xf32, #tpu.memory_space<vmem>>, %arg3: memref<1x128xf32, #tpu.memory_space<vmem>>, %arg4: memref<1x128xf32, #tpu.memory_space<vmem>>, %arg5: memref<1x128xf32, #tpu.memory_space<vmem>>, %arg6: memref<1x128xf32, #tpu.memory_space<vmem>>) attributes {dimension_semantics = [#tpu.dimension_semantics<arbitrary>], iteration_bounds = array<i64: 1>, scalar_prefetch = 0 : i64, scratch_operands = 4 : i64, tpu.core_type = #tpu.core_type<tc>, window_params = [{transform_indices = @transform_0, window_bounds = array<i64: 8, 128>}, {pipeline_mode = #tpu.pipeline_mode<synchronous>, transform_indices = @transform_1, window_bounds = array<i64: 1, 1>}]} {
    %c0 = arith.constant 0 : index
    %c0_0 = arith.constant 0 : index
    %0 = vector.load %arg1[%c0, %c0_0] : memref<8x128xf32, #tpu.memory_space<vmem>>, vector<8x128xf32>
    %c0_i32 = arith.constant 0 : i32
    %1 = arith.cmpi eq, %arg0, %c0_i32 : i32
    %2 = arith.extui %1 : i1 to i32
    %c0_i32_1 = arith.constant 0 : i32
    %3 = arith.cmpi ne, %2, %c0_i32_1 : i32
    scf.if %3 {
      %13 = tpu.iota {dimensions = array<i32: 0>} : vector<8x128xi32>
      %14 = tpu.iota {dimensions = array<i32: 1>} : vector<8x128xi32>
      %c128_i32 = arith.constant 128 : i32
      %15 = vector.broadcast %c128_i32 : i32 to vector<8x128xi32>
      %16 = arith.muli %13, %15 : vector<8x128xi32>
      %17 = arith.addi %16, %14 : vector<8x128xi32>
      %c16_i32 = arith.constant 16 : i32
      %18 = vector.broadcast %c16_i32 : i32 to vector<8x128xi32>
      %19 = arith.cmpi slt, %17, %18 : vector<8x128xi32>
      %cst = arith.constant 0x7F800000 : f32
      %20 = vector.broadcast %cst : f32 to vector<8x128xf32>
      %21 = arith.select %19, %0, %20 : vector<8x128xi1>, vector<8x128xf32>
      %22 = vector.shape_cast %21 : vector<8x128xf32> to vector<1x8x128xf32>
      %cst_8 = arith.constant dense<0x7F800000> : vector<1xf32>
      %23 = vector.multi_reduction <minimumf>, %22, %cst_8 [1, 2] : vector<1x8x128xf32> to vector<1xf32>
      %24 = vector.shape_cast %23 : vector<1xf32> to vector<1x1x1xf32>
      %25 = vector.extract %24[0, 0, 0] : f32 from vector<1x1x1xf32>
      %cst_9 = arith.constant 0.000000e+00 : f32
      %26 = vector.broadcast %cst_9 : f32 to vector<1x128xf32>
      %27 = vector.broadcast %25 : f32 to vector<1x128xf32>
      %28 = arith.addf %26, %27 : vector<1x128xf32>
      %c0_10 = arith.constant 0 : index
      %c0_11 = arith.constant 0 : index
      %29 = vector.load %arg6[%c0_10, %c0_11] : memref<1x128xf32, #tpu.memory_space<vmem>>, vector<1x128xf32>
      tpu.vector_store %arg6[%c0_10, %c0_11], %28 {strides = array<i32>} : memref<1x128xf32, #tpu.memory_space<vmem>>, vector<1x128xf32>,
      %cst_12 = arith.constant 0x7F800000 : f32
      %30 = vector.broadcast %cst_12 : f32 to vector<1x128xf32>
      %c0_13 = arith.constant 0 : index
      %c0_14 = arith.constant 0 : index
      %31 = vector.load %arg3[%c0_13, %c0_14] : memref<1x128xf32, #tpu.memory_space<vmem>>, vector<1x128xf32>
      tpu.vector_store %arg3[%c0_13, %c0_14], %30 {strides = array<i32>} : memref<1x128xf32, #tpu.memory_space<vmem>>, vector<1x128xf32>,
      %cst_15 = arith.constant 0.000000e+00 : f32
      %32 = vector.broadcast %cst_15 : f32 to vector<1x128xf32>
      %c0_16 = arith.constant 0 : index
      %c0_17 = arith.constant 0 : index
      %33 = vector.load %arg4[%c0_16, %c0_17] : memref<1x128xf32, #tpu.memory_space<vmem>>, vector<1x128xf32>
      tpu.vector_store %arg4[%c0_16, %c0_17], %32 {strides = array<i32>} : memref<1x128xf32, #tpu.memory_space<vmem>>, vector<1x128xf32>,
      %cst_18 = arith.constant 0.000000e+00 : f32
      %34 = vector.broadcast %cst_18 : f32 to vector<1x128xf32>
      %c0_19 = arith.constant 0 : index
      %c0_20 = arith.constant 0 : index
      %35 = vector.load %arg5[%c0_19, %c0_20] : memref<1x128xf32, #tpu.memory_space<vmem>>, vector<1x128xf32>
      tpu.vector_store %arg5[%c0_19, %c0_20], %34 {strides = array<i32>} : memref<1x128xf32, #tpu.memory_space<vmem>>, vector<1x128xf32>,
    } else {
    }
    %c0_2 = arith.constant 0 : index
    %c0_3 = arith.constant 0 : index
    %4 = vector.load %arg6[%c0_2, %c0_3] : memref<1x128xf32, #tpu.memory_space<vmem>>, vector<1x128xf32>
    %5 = vector.broadcast %4 : vector<1x128xf32> to vector<8x128xf32>
    %6 = arith.subf %0, %5 : vector<8x128xf32>
    %c0_i32_4 = arith.constant 0 : i32
    %7 = arith.cmpi eq, %arg0, %c0_i32_4 : i32
    %8 = arith.extui %7 : i1 to i32
    %c0_i32_5 = arith.constant 0 : i32
    %9 = arith.cmpi ne, %8, %c0_i32_5 : i32
    scf.if %9 {
      %13 = tpu.iota {dimensions = array<i32: 0>} : vector<8x128xi32>
      %14 = tpu.iota {dimensions = array<i32: 1>} : vector<8x128xi32>
      %c128_i32 = arith.constant 128 : i32
      %15 = vector.broadcast %c128_i32 : i32 to vector<8x128xi32>
      %16 = arith.muli %13, %15 : vector<8x128xi32>
      %17 = arith.addi %16, %14 : vector<8x128xi32>
      %c16_i32 = arith.constant 16 : i32
      %18 = vector.broadcast %c16_i32 : i32 to vector<8x128xi32>
      %19 = arith.cmpi slt, %17, %18 : vector<8x128xi32>
      %cst = arith.constant 0x7F800000 : f32
      %20 = vector.broadcast %cst : f32 to vector<8x128xf32>
      %21 = arith.select %19, %6, %20 : vector<8x128xi1>, vector<8x128xf32>
      %cst_8 = arith.constant dense<0x7F800000> : vector<128xf32>
      %22 = vector.multi_reduction <minimumf>, %21, %cst_8 [0] : vector<8x128xf32> to vector<128xf32>
      %23 = vector.shape_cast %22 : vector<128xf32> to vector<1x128xf32>
      %cst_9 = arith.constant 0.000000e+00 : f32
      %24 = vector.broadcast %cst_9 : f32 to vector<8x128xf32>
      %25 = arith.select %19, %6, %24 : vector<8x128xi1>, vector<8x128xf32>
      %c0_10 = arith.constant 0 : index
      %c0_11 = arith.constant 0 : index
      %26 = vector.load %arg3[%c0_10, %c0_11] : memref<1x128xf32, #tpu.memory_space<vmem>>, vector<1x128xf32>
      %27 = arith.minimumf %26, %23 : vector<1x128xf32>
      %c0_12 = arith.constant 0 : index
      %c0_13 = arith.constant 0 : index
      %28 = vector.load %arg3[%c0_12, %c0_13] : memref<1x128xf32, #tpu.memory_space<vmem>>, vector<1x128xf32>
      tpu.vector_store %arg3[%c0_12, %c0_13], %27 {strides = array<i32>} : memref<1x128xf32, #tpu.memory_space<vmem>>, vector<1x128xf32>,
      %c0_14 = arith.constant 0 : index
      %c0_15 = arith.constant 0 : index
      %29 = vector.load %arg4[%c0_14, %c0_15] : memref<1x128xf32, #tpu.memory_space<vmem>>, vector<1x128xf32>
      %cst_16 = arith.constant dense<0.000000e+00> : vector<128xf32>
      %30 = vector.multi_reduction <add>, %25, %cst_16 [0] : vector<8x128xf32> to vector<128xf32>
      %31 = vector.shape_cast %30 : vector<128xf32> to vector<1x128xf32>
      %32 = arith.addf %29, %31 : vector<1x128xf32>
      %c0_17 = arith.constant 0 : index
      %c0_18 = arith.constant 0 : index
      %33 = vector.load %arg4[%c0_17, %c0_18] : memref<1x128xf32, #tpu.memory_space<vmem>>, vector<1x128xf32>
      tpu.vector_store %arg4[%c0_17, %c0_18], %32 {strides = array<i32>} : memref<1x128xf32, #tpu.memory_space<vmem>>, vector<1x128xf32>,
      %c0_19 = arith.constant 0 : index
      %c0_20 = arith.constant 0 : index
      %34 = vector.load %arg5[%c0_19, %c0_20] : memref<1x128xf32, #tpu.memory_space<vmem>>, vector<1x128xf32>
      %35 = arith.mulf %25, %25 : vector<8x128xf32>
      %cst_21 = arith.constant dense<0.000000e+00> : vector<128xf32>
      %36 = vector.multi_reduction <add>, %35, %cst_21 [0] : vector<8x128xf32> to vector<128xf32>
      %37 = vector.shape_cast %36 : vector<128xf32> to vector<1x128xf32>
      %38 = arith.addf %34, %37 : vector<1x128xf32>
      %c0_22 = arith.constant 0 : index
      %c0_23 = arith.constant 0 : index
      %39 = vector.load %arg5[%c0_22, %c0_23] : memref<1x128xf32, #tpu.memory_space<vmem>>, vector<1x128xf32>
      tpu.vector_store %arg5[%c0_22, %c0_23], %38 {strides = array<i32>} : memref<1x128xf32, #tpu.memory_space<vmem>>, vector<1x128xf32>,
    } else {
    }
    %c0_i32_6 = arith.constant 0 : i32
    %10 = arith.cmpi eq, %arg0, %c0_i32_6 : i32
    %11 = arith.extui %10 : i1 to i32
    %c0_i32_7 = arith.constant 0 : i32
    %12 = arith.cmpi ne, %11, %c0_i32_7 : i32
    scf.if %12 {
      %c0_8 = arith.constant 0 : index
      %c0_9 = arith.constant 0 : index
      %13 = vector.load %arg3[%c0_8, %c0_9] : memref<1x128xf32, #tpu.memory_space<vmem>>, vector<1x128xf32>
      %14 = vector.shape_cast %13 : vector<1x128xf32> to vector<1x1x128xf32>
      %cst = arith.constant dense<0x7F800000> : vector<1xf32>
      %15 = vector.multi_reduction <minimumf>, %14, %cst [1, 2] : vector<1x1x128xf32> to vector<1xf32>
      %16 = vector.shape_cast %15 : vector<1xf32> to vector<1x1x1xf32>
      %17 = vector.extract %16[0, 0, 0] : f32 from vector<1x1x1xf32>
      %18 = vector.broadcast %17 : f32 to vector<1x1xf32>
      %c0_10 = arith.constant 0 : index
      %c0_11 = arith.constant 0 : index
      %19 = vector.load %arg4[%c0_10, %c0_11] : memref<1x128xf32, #tpu.memory_space<vmem>>, vector<1x128xf32>
      %20 = vector.shape_cast %19 : vector<1x128xf32> to vector<1x1x128xf32>
      %cst_12 = arith.constant dense<0.000000e+00> : vector<1xf32>
      %21 = vector.multi_reduction <add>, %20, %cst_12 [1, 2] : vector<1x1x128xf32> to vector<1xf32>
      %22 = vector.shape_cast %21 : vector<1xf32> to vector<1x1x1xf32>
      %23 = vector.extract %22[0, 0, 0] : f32 from vector<1x1x1xf32>
      %24 = vector.broadcast %23 : f32 to vector<1x1xf32>
      %c0_13 = arith.constant 0 : index
      %c0_14 = arith.constant 0 : index
      %25 = vector.load %arg5[%c0_13, %c0_14] : memref<1x128xf32, #tpu.memory_space<vmem>>, vector<1x128xf32>
      %26 = vector.shape_cast %25 : vector<1x128xf32> to vector<1x1x128xf32>
      %cst_15 = arith.constant dense<0.000000e+00> : vector<1xf32>
      %27 = vector.multi_reduction <add>, %26, %cst_15 [1, 2] : vector<1x1x128xf32> to vector<1xf32>
      %28 = vector.shape_cast %27 : vector<1xf32> to vector<1x1x1xf32>
      %29 = vector.extract %28[0, 0, 0] : f32 from vector<1x1x1xf32>
      %30 = vector.broadcast %29 : f32 to vector<1x1xf32>
      %cst_16 = arith.constant 2.000000e+00 : f32
      %31 = vector.broadcast %cst_16 : f32 to vector<1x1xf32>
      %32 = arith.mulf %31, %18 : vector<1x1xf32>
      %33 = arith.mulf %32, %24 : vector<1x1xf32>
      %34 = arith.subf %30, %33 : vector<1x1xf32>
      %cst_17 = arith.constant 1.600000e+01 : f32
      %35 = vector.broadcast %cst_17 : f32 to vector<1x1xf32>
      %36 = arith.mulf %35, %18 : vector<1x1xf32>
      %37 = arith.mulf %36, %18 : vector<1x1xf32>
      %38 = arith.addf %34, %37 : vector<1x1xf32>
      %cst_18 = arith.constant 1.600000e+01 : f32
      %39 = vector.broadcast %cst_18 : f32 to vector<1x1xf32>
      %40 = arith.mulf %39, %18 : vector<1x1xf32>
      %41 = arith.subf %24, %40 : vector<1x1xf32>
      %42 = arith.mulf %41, %41 : vector<1x1xf32>
      %43 = arith.divf %38, %42 : vector<1x1xf32>
      %cst_19 = arith.constant 6.250000e-02 : f32
      %44 = vector.broadcast %cst_19 : f32 to vector<1x1xf32>
      %45 = arith.subf %43, %44 : vector<1x1xf32>
      %c0_20 = arith.constant 0 : index
      %c0_21 = arith.constant 0 : index
      %46 = vector.load %arg2[%c0_20, %c0_21] : memref<1x1xf32, #tpu.memory_space<vmem>>, vector<1x1xf32>
      tpu.vector_store %arg2[%c0_20, %c0_21], %45 {strides = array<i32>} : memref<1x1xf32, #tpu.memory_space<vmem>>, vector<1x1xf32>,
    } else {
    }
    return
  }
  func.func @transform_0(%arg0: i32) -> (i32, i32) {
    %c0_i32 = arith.constant 0 : i32
    %c0_i32_0 = arith.constant 0 : i32
    return %arg0, %c0_i32 : i32, i32
  }
  func.func @transform_1(%arg0: i32) -> (i32, i32) {
    %c0_i32 = arith.constant 0 : i32
    %c0_i32_0 = arith.constant 0 : i32
    %c0_i32_1 = arith.constant 0 : i32
    return %c0_i32, %c0_i32_0 : i32, i32
  }
}

</mosaic_0001>

<llo_original>
// kernel: tpu_custom_call.1
$region0: #{tpu_custom_call.1}
  #allocation0 [shape = 'u32[]', space=smem, size = 0x4, offset = 0x4, fixed_abs, tag = 'smem constant byte address 0x4 - core index']
  #allocation1 [shape = 'u32[144,128]{1,0:T(1,128)}', space=vmem, size = 0x12000, scoped, tag = 'internal scratch']
  #allocation2 [shape = 'f32[1,128]{1,0:T(1,128)}', space=vmem, size = 0x200, scoped, tag = 'scratch operand']
  #allocation3 [shape = 'f32[1,128]{1,0:T(1,128)}', space=vmem, size = 0x200, scoped, tag = 'scratch operand']
  #allocation4 [shape = 'f32[1,128]{1,0:T(1,128)}', space=vmem, size = 0x200, scoped, tag = 'scratch operand']
  #allocation5 [shape = 'f32[1,128]{1,0:T(1,128)}', space=vmem, size = 0x200, scoped, tag = 'scratch operand']
  %s0 = inlined_call_operand.hbm [shape: f32[1,128], index: 0, kind: input, shape index: {}]
  %s1 = inlined_call_operand.hbm [shape: f32[1,1], index: 1, kind: output, shape index: {}]
  %s2 = sld [smem:[#allocation0]]
  $region26: #{tpu_custom_call.1} parent=0
    _
  %s4 = ssub.s32 1, %s2
  %s5 = scalar_select 0, %s4, %s2
  $region1: #{tpu_custom_call.1} parent=0
    #allocation6 [shape = 'u8[4096]{0}', space=vmem, size = 0x1000, scoped, tag = 'input window, operand 0, single buffered']
    #allocation7 [shape = 's32[1]{0}', space=sflag, size = 0x4, scoped, tag = 'scoped memory for tpu_custom_call.1']
    #allocation8 [shape = 's32[1]{0}', space=sflag, size = 0x4, scoped, tag = 'scoped memory for tpu_custom_call.1']
    #allocation9 [shape = 'u8[512]{0}', space=vmem, size = 0x400, scoped, tag = 'output window, operand 0, single buffered']
    %6 = vsyncpa [#allocation7], 0
    %7 = vsyncpa [#allocation8], 0
    // Predicated region
    $region2: #{tpu_custom_call.1} parent=1 // pred_check
      _
    $region3: #{tpu_custom_call.1} parent=1 // pred_check_branch
      %9 = sbr.rel (0) target = $region5
    $region4: #{tpu_custom_call.1} parent=1 // pred_region
      %s11 = ssub.s32 128, 16
      %12 = vsyncadd [#allocation7], %s11
      %s13 = sshll.u32 [#allocation6], 4
      %s14 = int_to_ptr.vmem [resolvable:$true] %s13
      %19 = dma.hbm_to_vmem [thread:$0]  %s0, 16, %s14, [#allocation7], 16, 16, 1
    $region5: #{tpu_custom_call.1} parent=1 // pred_fallthru
      _
    // Predicated region
    $region6: #{tpu_custom_call.1} parent=1 // pred_check
      _
    $region7: #{tpu_custom_call.1} parent=1 // pred_check_branch
      %21 = sbr.rel (0) target = $region9
    $region8: #{tpu_custom_call.1} parent=1 // pred_region
      %22 = dma.done [#allocation7], 128
    $region9: #{tpu_custom_call.1} parent=1 // pred_fallthru
      _
    %v23 = vld [vmem:[#allocation6] sm:$0xff]
    %p24 = scmp.eq.s32.totalorder 0, 0
    // Predicated region
    $region10: #{tpu_custom_call.1} parent=1 // pred_check
      %p25 = pneg %p24
    $region11: #{tpu_custom_call.1} parent=1 // pred_check_branch
      %27 = sbr.rel (%p25) target = $region13
    $region12: #{tpu_custom_call.1} parent=1 // pred_region
      %v28 = vlaneseq
      %v29 = vshrl.u32 %v28, 7
      %v30 = vlaneseq
      %v31 = vand.u32 %v30, 127
      %v32 = vmul.u32 %v29, 128
      %v33 = vadd.s32 %v32, %v31
      %vm34 = vcmp.lt.s32.totalorder %v33, 16
      %v35 = vsel %vm34, %v23, inf
      %36 = vmin.xlane.f32.xlu0 %v35
      %v37 = vpop.xlane.xlu0 %36
      %v38 = vrot.slane %v37, 4
      %v39 = vmin.f32 %v37, %v38
      %v40 = vrot.slane %v39, 2
      %v41 = vmin.f32 %v39, %v40
      %v42 = vrot.slane %v41, 1
      %v43 = vmin.f32 %v41, %v42
      %s44 = vtos %v43
      %v45 = vstv %s44
      %v46 = vadd.f32 %v45, 0.0
      %47 = vst [vmem:[#allocation5] sm:$0x1] %v46
      %48 = vst [vmem:[#allocation2] sm:$0x1] inf
      %49 = vst [vmem:[#allocation3] sm:$0x1] 0.0
      %50 = vst [vmem:[#allocation4] sm:$0x1] 0.0
    $region13: #{tpu_custom_call.1} parent=1 // pred_fallthru
      _
    %v51 = vld [vmem:[#allocation5] sm:$0x1]
    %v53 = vlaneseq
    %v54 = vshrl.u32 %v53, 7
    %v55 = vsub.s32 0, %v54
    %v56 = vrot.slane %v51, %v55
    %v58 = vsub.f32 %v23, %v56
    // Predicated region
    $region14: #{tpu_custom_call.1} parent=1 // pred_check
      %p59 = pneg %p24
    $region15: #{tpu_custom_call.1} parent=1 // pred_check_branch
      %61 = sbr.rel (%p59) target = $region17
    $region16: #{tpu_custom_call.1} parent=1 // pred_region
      %v62 = vlaneseq
      %v63 = vshrl.u32 %v62, 7
      %v64 = vlaneseq
      %v65 = vand.u32 %v64, 127
      %v66 = vmul.u32 %v63, 128
      %v67 = vadd.s32 %v66, %v65
      %vm68 = vcmp.lt.s32.totalorder %v67, 16
      %v69 = vsel %vm68, %v58, inf
      %v70 = vrot.slane %v69, 4
      %v71 = vmin.f32 %v69, %v70
      %v72 = vrot.slane %v71, 2
      %v73 = vmin.f32 %v71, %v72
      %v74 = vrot.slane %v73, 1
      %v75 = vmin.f32 %v73, %v74
      %v76 = vsel %vm68, %v58, 0.0
      %v77 = vld [vmem:[#allocation2] sm:$0x1]
      %v78 = vmin.f32 %v77, %v75
      %79 = vst [vmem:[#allocation2] sm:$0x1] %v78
      %v80 = vld [vmem:[#allocation3] sm:$0x1]
      %v81 = vrot.slane %v76, 4
      %v82 = vadd.f32 %v76, %v81
      %v83 = vrot.slane %v82, 2
      %v84 = vadd.f32 %v82, %v83
      %v85 = vrot.slane %v84, 1
      %v86 = vadd.f32 %v84, %v85
      %v87 = vadd.f32 %v80, %v86
      %88 = vst [vmem:[#allocation3] sm:$0x1] %v87
      %v89 = vld [vmem:[#allocation4] sm:$0x1]
      %v90 = vmul.f32 %v76, %v76
      %v91 = vrot.slane %v90, 4
      %v92 = vadd.f32 %v90, %v91
      %v93 = vrot.slane %v92, 2
      %v94 = vadd.f32 %v92, %v93
      %v95 = vrot.slane %v94, 1
      %v96 = vadd.f32 %v94, %v95
      %v97 = vadd.f32 %v89, %v96
      %98 = vst [vmem:[#allocation4] sm:$0x1] %v97
      %v99 = vld [vmem:[#allocation2] sm:$0x1]
      %vm100 = vcmask 1040384
      %v101 = vsel %vm100, %v99, inf
      %102 = vmin.xlane.f32.xlu0 %v101
      %v103 = vpop.xlane.xlu0 %102
      %v104 = vrot.slane %v103, 4
      %v105 = vmin.f32 %v103, %v104
      %v106 = vrot.slane %v105, 2
      %v107 = vmin.f32 %v105, %v106
      %v108 = vrot.slane %v107, 1
      %v109 = vmin.f32 %v107, %v108
      %s110 = vtos %v109
      %v111 = vstv %s110
      %v112 = vld [vmem:[#allocation3] sm:$0x1]
      %v113 = vsel %vm100, %v112, 0.0
      %114 = vadd.xlane.f32.xlu0 %v113
      %v115 = vpop.xlane.xlu0 %114
      %v116 = vrot.slane %v115, 4
      %v117 = vadd.f32 %v115, %v116
      %v118 = vrot.slane %v117, 2
      %v119 = vadd.f32 %v117, %v118
      %v120 = vrot.slane %v119, 1
      %v121 = vadd.f32 %v119, %v120
      %s122 = vtos %v121
      %v123 = vstv %s122
      %v124 = vld [vmem:[#allocation4] sm:$0x1]
      %v125 = vsel %vm100, %v124, 0.0
      %126 = vadd.xlane.f32.xlu0 %v125
      %v127 = vpop.xlane.xlu0 %126
      %v128 = vrot.slane %v127, 4
      %v129 = vadd.f32 %v127, %v128
      %v130 = vrot.slane %v129, 2
      %v131 = vadd.f32 %v129, %v130
      %v132 = vrot.slane %v131, 1
      %v133 = vadd.f32 %v131, %v132
      %s134 = vtos %v133
      %v135 = vstv %s134
      %v136 = vmul.f32 %v111, 2.0
      %v137 = vmul.f32 %v136, %v123
      %v138 = vsub.f32 %v135, %v137
      %v139 = vmul.f32 %v111, 16.0
      %v140 = vmul.f32 %v139, %v111
      %v141 = vadd.f32 %v138, %v140
      %v142 = vsub.f32 %v123, %v139
      %v143 = vmul.f32 %v142, %v142
      %v144 = vrcp.pop %v143
      %v145 = vmul.f32 %v141, %v144
      %v146 = vsub.f32 %v145, 0.0625
      %vm147 = vcmask 0
      %148 = vst.msk [vmem:[#allocation9] sm:$0x1] %vm147, %v146
    $region17: #{tpu_custom_call.1} parent=1 // pred_fallthru
      _
    // Predicated region
    $region18: #{tpu_custom_call.1} parent=1 // pred_check
      _
    $region19: #{tpu_custom_call.1} parent=1 // pred_check_branch
      %150 = sbr.rel (0) target = $region21
    $region20: #{tpu_custom_call.1} parent=1 // pred_region
      %s152 = ssub.s32 16, 16
      %153 = vsyncadd [#allocation8], %s152
      %s155 = sshll.u32 [#allocation9], 4
      %s156 = int_to_ptr.vmem [resolvable:$true] %s155
      %158 = dma.vmem_to_hbm [thread:$0]  %s156, 16, %s1, [#allocation8]
    $region21: #{tpu_custom_call.1} parent=1 // pred_fallthru
      _
    // Predicated region
    $region22: #{tpu_custom_call.1} parent=1 // pred_check
      _
    $region23: #{tpu_custom_call.1} parent=1 // pred_check_branch
      %160 = sbr.rel (0) target = $region25
    $region24: #{tpu_custom_call.1} parent=1 // pred_region
      %161 = dma.done [#allocation8], 16
    $region25: #{tpu_custom_call.1} parent=1 // pred_fallthru
      _
    %162 = vsyncpa [#allocation7], 1
    %163 = vsyncpa [#allocation8], 1

</llo_original>
